<compile_context>
chip_gen: v5e
topology: v5e:2x2
jax: 0.10.0
libtpu: 0.0.40
codegen_flags: <defaults>
</compile_context>

<pallas_src>
import jax
import jax.numpy as jnp
from jax.experimental import pallas as pl
from jax.experimental.pallas import tpu as pltpu


def _round_up(x, m):
    return ((x + m - 1) // m) * m


def _text_clf_kernel(seg_ref, gath_ref, w1_ref, b1_ref, w2_ref, b2_ref, out_ref):
    # EmbeddingBag(mode='sum'): embedded[b, :] = sum_{t in bag b} gathered[t, :]
    embedded = jnp.dot(seg_ref[...], gath_ref[...],
                       preferred_element_type=jnp.float32)            # (Bt, D) f32

    # fc -> relu   (W1 passed pre-transposed as (D, H))
    h = jnp.dot(embedded.astype(jnp.bfloat16), w1_ref[...],
                preferred_element_type=jnp.float32) + b1_ref[...]     # (Bt, H) f32
    h = jnp.maximum(h, 0.0)

    # fc2          (W2 passed pre-transposed as (H, C_pad))
    out = jnp.dot(h.astype(jnp.bfloat16), w2_ref[...],
                  preferred_element_type=jnp.float32) + b2_ref[...]   # (Bt, C_pad)
    out_ref[...] = out


def text_classification_forward(text, offsets, emb, w1, b1, w2, b2, *, b_tile=256):
    """Forward pass. text: (T,) int32 flat tokens; offsets: (B,) int32 bag starts."""
    T = text.shape[0]
    B = offsets.shape[0]
    V, D = emb.shape
    H = w1.shape[0]
    C = w2.shape[0]

    bf16, f32 = jnp.bfloat16, jnp.float32

    # ---- wrapper-side glue (pure index / layout plumbing, fused by XLA) ----
    # Real gather: only the T touched rows of the (V, D) table are materialized.
    gathered = jnp.take(emb, text, axis=0)                             # (T, D)

    # Segment matrix: seg[b, t] = 1 iff token t belongs to bag b (PyTorch
    # EmbeddingBag offsets convention; repeated offsets -> zero rows).
    bag_of_token = jnp.searchsorted(
        offsets, jnp.arange(T, dtype=offsets.dtype), side="right") - 1
    seg = bag_of_token[None, :] == jnp.arange(B)[:, None]              # (B, T) bool

    # ---- pad to TPU-friendly tiles (lane = 128, sublane = 8) ----
    b_tile = min(b_tile, _round_up(B, 8))
    B_pad = _round_up(B, b_tile)
    T_pad = _round_up(T, 128)
    D_pad = _round_up(D, 128)
    H_pad = _round_up(H, 128)
    C_pad = _round_up(C, 128)     # lane-dense output slab

    seg_p = jnp.zeros((B_pad, T_pad), bf16).at[:B, :T].set(seg.astype(bf16))
    gath_p = jnp.zeros((T_pad, D_pad), bf16).at[:T, :D].set(gathered.astype(bf16))
    w1t_p = jnp.zeros((D_pad, H_pad), bf16).at[:D, :H].set(w1.T.astype(bf16))
    w2t_p = jnp.zeros((H_pad, C_pad), bf16).at[:H, :C].set(w2.T.astype(bf16))
    b1_p = jnp.zeros((1, H_pad), f32).at[0, :H].set(b1.astype(f32))
    b2_p = jnp.zeros((1, C_pad), f32).at[0, :C].set(b2.astype(f32))

    grid = (B_pad // b_tile,)
    resident = lambda shape: pl.BlockSpec(shape, lambda i: (0, 0))

    out_p = pl.pallas_call(
        _text_clf_kernel,
        out_shape=jax.ShapeDtypeStruct((B_pad, C_pad), f32),
        grid=grid,
        in_specs=[
            pl.BlockSpec((b_tile, T_pad), lambda i: (i, 0)),   # seg, batch-tiled
            resident((T_pad, D_pad)),                          # gathered emb rows
            resident((D_pad, H_pad)),                          # W1^T (resident)
            resident((1, H_pad)),                              # b1
            resident((H_pad, C_pad)),                          # W2^T (resident)
            resident((1, C_pad)),                              # b2
        ],
        out_specs=pl.BlockSpec((b_tile, C_pad), lambda i: (i, 0)),
        compiler_params=pltpu.CompilerParams(
            dimension_semantics=("parallel",),   # batch axis -> megacore on v7x
            vmem_limit_bytes=48 << 20,           # safe on 64 MiB (v7x) and 128 MiB
        ),
    )(seg_p, gath_p, w1t_p, b1_p, w2t_p, b2_p)

    return out_p[:B, :C]


def init_params(key, vocab_size, embed_dim, hidden_dim, num_class):
    k_emb, k_w1, k_w2 = jax.random.split(key, 3)
    # nn.EmbeddingBag default init: N(0, 1)
    emb = jax.random.normal(k_emb, (vocab_size, embed_dim), jnp.float32)

    def xavier_uniform(k, shape):
        fan_out, fan_in = shape
        bound = (6.0 / (fan_in + fan_out)) ** 0.5
        return jax.random.uniform(k, shape, jnp.float32, -bound, bound)

    w1 = xavier_uniform(k_w1, (hidden_dim, embed_dim))
    b1 = jnp.zeros((hidden_dim,), jnp.float32)
    w2 = xavier_uniform(k_w2, (num_class, hidden_dim))
    b2 = jnp.zeros((num_class,), jnp.float32)
    return emb, w1, b1, w2, b2


if __name__ == "__main__":
    vocab_size, embed_dim, hidden_dim, num_class = 32, 16, 32, 4
    batch, total_tokens = 2, 8

    key = jax.random.PRNGKey(0)
    k_params, k_text = jax.random.split(key)
    emb, w1, b1, w2, b2 = init_params(k_params, vocab_size, embed_dim,
                                      hidden_dim, num_class)

    # Two bags: tokens [0:5) belong to bag 0, tokens [5:8) to bag 1.
    text = jax.random.randint(k_text, (total_tokens,), 0, vocab_size,
                              dtype=jnp.int32)
    offsets = jnp.array([0, 5], dtype=jnp.int32)

    out = text_classification_forward(text, offsets, emb, w1, b1, w2, b2)
    out = jax.block_until_ready(out)

    # Pure-JAX f32 reference for sanity (kernel uses bf16 MXU inputs with f32
    # accumulation, so allow a bf16-sized tolerance).
    def ref_forward(text, offsets):
        gathered = emb[text]                                   # (T, D)
        bag = jnp.searchsorted(offsets, jnp.arange(text.shape[0]),
                               side="right") - 1
        embedded = jax.ops.segment_sum(gathered, bag, num_segments=batch)
        h = jnp.maximum(embedded @ w1.T + b1, 0.0)
        return h @ w2.T + b2

    ref = ref_forward(text, offsets)
    assert out.shape == (batch, num_class)
    assert jnp.allclose(out, ref, atol=0.15, rtol=0.05), (out, ref)
    print("KERNEL_OK")
</pallas_src>

<mosaic_0001>
module attributes {stable_mosaic.version = 11 : i64} {
  func.func @_text_clf_kernel(%arg0: i32, %arg1: memref<8x128xbf16, #tpu.memory_space<vmem>>, %arg2: memref<128x128xbf16, #tpu.memory_space<vmem>>, %arg3: memref<128x128xbf16, #tpu.memory_space<vmem>>, %arg4: memref<1x128xf32, #tpu.memory_space<vmem>>, %arg5: memref<128x128xbf16, #tpu.memory_space<vmem>>, %arg6: memref<1x128xf32, #tpu.memory_space<vmem>>, %arg7: memref<8x128xf32, #tpu.memory_space<vmem>>) attributes {dimension_semantics = [#tpu.dimension_semantics<parallel>], iteration_bounds = array<i64: 1>, scalar_prefetch = 0 : i64, scratch_operands = 0 : i64, tpu.core_type = #tpu.core_type<tc>, window_params = [{transform_indices = @transform_0, window_bounds = array<i64: 8, 128>}, {pipeline_mode = #tpu.pipeline_mode<synchronous>, transform_indices = @transform_1, window_bounds = array<i64: 128, 128>}, {pipeline_mode = #tpu.pipeline_mode<synchronous>, transform_indices = @transform_2, window_bounds = array<i64: 128, 128>}, {pipeline_mode = #tpu.pipeline_mode<synchronous>, transform_indices = @transform_3, window_bounds = array<i64: 1, 128>}, {pipeline_mode = #tpu.pipeline_mode<synchronous>, transform_indices = @transform_4, window_bounds = array<i64: 128, 128>}, {pipeline_mode = #tpu.pipeline_mode<synchronous>, transform_indices = @transform_5, window_bounds = array<i64: 1, 128>}, {transform_indices = @transform_6, window_bounds = array<i64: 8, 128>}]} {
    %c0 = arith.constant 0 : index
    %c0_0 = arith.constant 0 : index
    %0 = vector.load %arg1[%c0, %c0_0] : memref<8x128xbf16, #tpu.memory_space<vmem>>, vector<8x128xbf16>
    %c0_1 = arith.constant 0 : index
    %c0_2 = arith.constant 0 : index
    %1 = vector.load %arg2[%c0_1, %c0_2] : memref<128x128xbf16, #tpu.memory_space<vmem>>, vector<128x128xbf16>
    %cst = arith.constant dense<0.000000e+00> : vector<8x128xf32>
    %2 = tpu.matmul %0, %1, %cst {dimension_numbers = #tpu.dot_dimension_numbers<[1], [0], [0], [1], [0, 0, 1, 1], [], []>} : vector<8x128xbf16>, vector<128x128xbf16>, vector<8x128xf32> -> vector<8x128xf32>
    %3 = arith.truncf %2 : vector<8x128xf32> to vector<8x128xbf16>
    %c0_3 = arith.constant 0 : index
    %c0_4 = arith.constant 0 : index
    %4 = vector.load %arg3[%c0_3, %c0_4] : memref<128x128xbf16, #tpu.memory_space<vmem>>, vector<128x128xbf16>
    %cst_5 = arith.constant dense<0.000000e+00> : vector<8x128xf32>
    %5 = tpu.matmul %3, %4, %cst_5 {dimension_numbers = #tpu.dot_dimension_numbers<[1], [0], [0], [1], [0, 0, 1, 1], [], []>} : vector<8x128xbf16>, vector<128x128xbf16>, vector<8x128xf32> -> vector<8x128xf32>
    %c0_6 = arith.constant 0 : index
    %c0_7 = arith.constant 0 : index
    %6 = vector.load %arg4[%c0_6, %c0_7] : memref<1x128xf32, #tpu.memory_space<vmem>>, vector<1x128xf32>
    %7 = vector.broadcast %6 : vector<1x128xf32> to vector<8x128xf32>
    %8 = arith.addf %5, %7 : vector<8x128xf32>
    %cst_8 = arith.constant 0.000000e+00 : f32
    %9 = vector.broadcast %cst_8 : f32 to vector<8x128xf32>
    %10 = arith.maximumf %8, %9 : vector<8x128xf32>
    %11 = arith.truncf %10 : vector<8x128xf32> to vector<8x128xbf16>
    %c0_9 = arith.constant 0 : index
    %c0_10 = arith.constant 0 : index
    %12 = vector.load %arg5[%c0_9, %c0_10] : memref<128x128xbf16, #tpu.memory_space<vmem>>, vector<128x128xbf16>
    %cst_11 = arith.constant dense<0.000000e+00> : vector<8x128xf32>
    %13 = tpu.matmul %11, %12, %cst_11 {dimension_numbers = #tpu.dot_dimension_numbers<[1], [0], [0], [1], [0, 0, 1, 1], [], []>} : vector<8x128xbf16>, vector<128x128xbf16>, vector<8x128xf32> -> vector<8x128xf32>
    %c0_12 = arith.constant 0 : index
    %c0_13 = arith.constant 0 : index
    %14 = vector.load %arg6[%c0_12, %c0_13] : memref<1x128xf32, #tpu.memory_space<vmem>>, vector<1x128xf32>
    %15 = vector.broadcast %14 : vector<1x128xf32> to vector<8x128xf32>
    %16 = arith.addf %13, %15 : vector<8x128xf32>
    %c0_14 = arith.constant 0 : index
    %c0_15 = arith.constant 0 : index
    %17 = vector.load %arg7[%c0_14, %c0_15] : memref<8x128xf32, #tpu.memory_space<vmem>>, vector<8x128xf32>
    tpu.vector_store %arg7[%c0_14, %c0_15], %16 {strides = array<i32>} : memref<8x128xf32, #tpu.memory_space<vmem>>, vector<8x128xf32>,
    return
  }
  func.func @transform_0(%arg0: i32) -> (i32, i32) {
    %c0_i32 = arith.constant 0 : i32
    %c0_i32_0 = arith.constant 0 : i32
    return %arg0, %c0_i32 : i32, i32
  }
  func.func @transform_1(%arg0: i32) -> (i32, i32) {
    %c0_i32 = arith.constant 0 : i32
    %c0_i32_0 = arith.constant 0 : i32
    %c0_i32_1 = arith.constant 0 : i32
    return %c0_i32, %c0_i32_0 : i32, i32
  }
  func.func @transform_2(%arg0: i32) -> (i32, i32) {
    %c0_i32 = arith.constant 0 : i32
    %c0_i32_0 = arith.constant 0 : i32
    %c0_i32_1 = arith.constant 0 : i32
    return %c0_i32, %c0_i32_0 : i32, i32
  }
  func.func @transform_3(%arg0: i32) -> (i32, i32) {
    %c0_i32 = arith.constant 0 : i32
    %c0_i32_0 = arith.constant 0 : i32
    %c0_i32_1 = arith.constant 0 : i32
    return %c0_i32, %c0_i32_0 : i32, i32
  }
  func.func @transform_4(%arg0: i32) -> (i32, i32) {
    %c0_i32 = arith.constant 0 : i32
    %c0_i32_0 = arith.constant 0 : i32
    %c0_i32_1 = arith.constant 0 : i32
    return %c0_i32, %c0_i32_0 : i32, i32
  }
  func.func @transform_5(%arg0: i32) -> (i32, i32) {
    %c0_i32 = arith.constant 0 : i32
    %c0_i32_0 = arith.constant 0 : i32
    %c0_i32_1 = arith.constant 0 : i32
    return %c0_i32, %c0_i32_0 : i32, i32
  }
  func.func @transform_6(%arg0: i32) -> (i32, i32) {
    %c0_i32 = arith.constant 0 : i32
    %c0_i32_0 = arith.constant 0 : i32
    return %arg0, %c0_i32 : i32, i32
  }
}

</mosaic_0001>

<llo_original>
// kernel: tpu_custom_call.1
$region0: #{tpu_custom_call.1}
  #allocation0 [shape = 'u32[]', space=smem, size = 0x4, offset = 0x4, fixed_abs, tag = 'smem constant byte address 0x4 - core index']
  #allocation1 [shape = 'u32[72,128]{1,0:T(1,128)}', space=vmem, size = 0x9000, scoped, tag = 'internal scratch']
  %s0 = inlined_call_operand.hbm [shape: bf16[8,128], index: 0, kind: input, shape index: {}]
  %s1 = inlined_call_operand.hbm [shape: bf16[128,128], index: 1, kind: input, shape index: {}]
  %s2 = inlined_call_operand.hbm [shape: bf16[128,128], index: 2, kind: input, shape index: {}]
  %s3 = inlined_call_operand.vmem [shape: f32[1,128], index: 3, kind: input, shape index: {}]
  %s4 = inlined_call_operand.hbm [shape: bf16[128,128], index: 4, kind: input, shape index: {}]
  %s5 = inlined_call_operand.vmem [shape: f32[1,128], index: 5, kind: input, shape index: {}]
  %s6 = inlined_call_operand.hbm [shape: f32[8,128], index: 6, kind: output, shape index: {}]
  %s7 = sld [smem:[#allocation0]]
  $region50: #{tpu_custom_call.1} parent=0
    _
  %s9 = ssub.s32 1, %s7
  %s10 = scalar_select 0, %s9, %s7
  $region1: #{tpu_custom_call.1} parent=0
    #allocation2 [shape = 'u8[2048]{0}', space=vmem, size = 0x800, scoped, tag = 'input window, operand 0, single buffered']
    #allocation3 [shape = 's32[1]{0}', space=sflag, size = 0x4, scoped, tag = 'scoped memory for tpu_custom_call.1']
    #allocation4 [shape = 's32[1]{0}', space=sflag, size = 0x4, scoped, tag = 'scoped memory for tpu_custom_call.1']
    #allocation5 [shape = 'u8[32768]{0}', space=vmem, size = 0x8000, scoped, tag = 'input window, operand 1, single buffered']
    #allocation6 [shape = 's32[1]{0}', space=sflag, size = 0x4, scoped, tag = 'scoped memory for tpu_custom_call.1']
    #allocation7 [shape = 'u8[32768]{0}', space=vmem, size = 0x8000, scoped, tag = 'input window, operand 2, single buffered']
    #allocation8 [shape = 'u8[32768]{0}', space=vmem, size = 0x8000, scoped, tag = 'input window, operand 4, single buffered']
    #allocation9 [shape = 's32[1]{0}', space=sflag, size = 0x4, scoped, tag = 'scoped memory for tpu_custom_call.1']
    #allocation10 [shape = 'u8[4096]{0}', space=vmem, size = 0x1000, scoped, tag = 'output window, operand 0, single buffered']
    %11 = vsyncpa [#allocation3], 0
    %12 = vsyncpa [#allocation6], 0
    %13 = vsyncpa [#allocation9], 0
    %14 = vsyncpa [#allocation4], 0
    // Predicated region
    $region2: #{tpu_custom_call.1} parent=1 // pred_check
      _
    $region3: #{tpu_custom_call.1} parent=1 // pred_check_branch
      %16 = sbr.rel (0) target = $region5
    $region4: #{tpu_custom_call.1} parent=1 // pred_region
      %18 = vsyncadd [#allocation3], 0
      %s20 = sshll.u32 %s0, 4
      %s21 = int_to_ptr.hbm [resolvable:$true] %s20
      %s22 = sshll.u32 [#allocation2], 4
      %s23 = int_to_ptr.vmem [resolvable:$true] %s22
      %25 = dma.hbm_to_vmem [thread:$0]  %s21, 64, %s23, [#allocation3]
    $region5: #{tpu_custom_call.1} parent=1 // pred_fallthru
      _
    // Predicated region
    $region6: #{tpu_custom_call.1} parent=1 // pred_check
      _
    $region7: #{tpu_custom_call.1} parent=1 // pred_check_branch
      %27 = sbr.rel (0) target = $region9
    $region8: #{tpu_custom_call.1} parent=1 // pred_region
      %29 = vsyncadd [#allocation6], 0
      %s30 = sshll.u32 %s1, 4
      %s31 = int_to_ptr.hbm [resolvable:$true] %s30
      %s32 = sshll.u32 [#allocation5], 4
      %s33 = int_to_ptr.vmem [resolvable:$true] %s32
      %38 = dma.hbm_to_vmem [thread:$0]  %s31, 1024, %s33, [#allocation6], 64, 64, 4
    $region9: #{tpu_custom_call.1} parent=1 // pred_fallthru
      _
    // Predicated region
    $region10: #{tpu_custom_call.1} parent=1 // pred_check
      _
    $region11: #{tpu_custom_call.1} parent=1 // pred_check_branch
      %40 = sbr.rel (0) target = $region13
    $region12: #{tpu_custom_call.1} parent=1 // pred_region
      %42 = vsyncadd [#allocation6], 0
      %s43 = sshll.u32 %s2, 4
      %s44 = int_to_ptr.hbm [resolvable:$true] %s43
      %s45 = sshll.u32 [#allocation7], 4
      %s46 = int_to_ptr.vmem [resolvable:$true] %s45
      %51 = dma.hbm_to_vmem [thread:$0]  %s44, 1024, %s46, [#allocation6], 64, 64, 4
    $region13: #{tpu_custom_call.1} parent=1 // pred_fallthru
      _
    // Predicated region
    $region14: #{tpu_custom_call.1} parent=1 // pred_check
      _
    $region15: #{tpu_custom_call.1} parent=1 // pred_check_branch
      %53 = sbr.rel (0) target = $region17
    $region16: #{tpu_custom_call.1} parent=1 // pred_region
      _
    $region17: #{tpu_custom_call.1} parent=1 // pred_fallthru
      _
    // Predicated region
    $region18: #{tpu_custom_call.1} parent=1 // pred_check
      _
    $region19: #{tpu_custom_call.1} parent=1 // pred_check_branch
      %55 = sbr.rel (0) target = $region21
    $region20: #{tpu_custom_call.1} parent=1 // pred_region
      %57 = vsyncadd [#allocation9], 0
      %s58 = sshll.u32 %s4, 4
      %s59 = int_to_ptr.hbm [resolvable:$true] %s58
      %s60 = sshll.u32 [#allocation8], 4
      %s61 = int_to_ptr.vmem [resolvable:$true] %s60
      %66 = dma.hbm_to_vmem [thread:$0]  %s59, 1024, %s61, [#allocation9], 64, 64, 4
    $region21: #{tpu_custom_call.1} parent=1 // pred_fallthru
      _
    // Predicated region
    $region22: #{tpu_custom_call.1} parent=1 // pred_check
      _
    $region23: #{tpu_custom_call.1} parent=1 // pred_check_branch
      %68 = sbr.rel (0) target = $region25
    $region24: #{tpu_custom_call.1} parent=1 // pred_region
      _
    $region25: #{tpu_custom_call.1} parent=1 // pred_fallthru
      _
    // Predicated region
    $region26: #{tpu_custom_call.1} parent=1 // pred_check
      _
    $region27: #{tpu_custom_call.1} parent=1 // pred_check_branch
      %70 = sbr.rel (0) target = $region29
    $region28: #{tpu_custom_call.1} parent=1 // pred_region
      %72 = dma.done [#allocation3], 64
    $region29: #{tpu_custom_call.1} parent=1 // pred_fallthru
      _
    // Predicated region
    $region30: #{tpu_custom_call.1} parent=1 // pred_check
      _
    $region31: #{tpu_custom_call.1} parent=1 // pred_check_branch
      %74 = sbr.rel (0) target = $region33
    $region32: #{tpu_custom_call.1} parent=1 // pred_region
      %76 = dma.done [#allocation6], 1024
    $region33: #{tpu_custom_call.1} parent=1 // pred_fallthru
      _
    // Predicated region
    $region34: #{tpu_custom_call.1} parent=1 // pred_check
      _
    $region35: #{tpu_custom_call.1} parent=1 // pred_check_branch
      %78 = sbr.rel (0) target = $region37
    $region36: #{tpu_custom_call.1} parent=1 // pred_region
      %80 = dma.done [#allocation6], 1024
    $region37: #{tpu_custom_call.1} parent=1 // pred_fallthru
      _
    // Predicated region
    $region38: #{tpu_custom_call.1} parent=1 // pred_check
      _
    $region39: #{tpu_custom_call.1} parent=1 // pred_check_branch
      %82 = sbr.rel (0) target = $region41
    $region40: #{tpu_custom_call.1} parent=1 // pred_region
      %84 = dma.done [#allocation9], 1024
    $region41: #{tpu_custom_call.1} parent=1 // pred_fallthru
      _
    %v85 = vld [vmem:[#allocation2] sm:$0xf]
    %v86 = vld [vmem:[#allocation5] sm:$0xf]
    %v87 = vld [vmem:[#allocation5 + $0x4] sm:$0xf]
    %v88 = vld [vmem:[#allocation5 + $0x8] sm:$0xf]
    %v89 = vld [vmem:[#allocation5 + $0xc] sm:$0xf]
    %v90 = vld [vmem:[#allocation5 + $0x10] sm:$0xf]
    %v91 = vld [vmem:[#allocation5 + $0x14] sm:$0xf]
    %v92 = vld [vmem:[#allocation5 + $0x18] sm:$0xf]
    %v93 = vld [vmem:[#allocation5 + $0x1c] sm:$0xf]
    %v94 = vld [vmem:[#allocation5 + $0x20] sm:$0xf]
    %v95 = vld [vmem:[#allocation5 + $0x24] sm:$0xf]
    %v96 = vld [vmem:[#allocation5 + $0x28] sm:$0xf]
    %v97 = vld [vmem:[#allocation5 + $0x2c] sm:$0xf]
    %v98 = vld [vmem:[#allocation5 + $0x30] sm:$0xf]
    %v99 = vld [vmem:[#allocation5 + $0x34] sm:$0xf]
    %v100 = vld [vmem:[#allocation5 + $0x38] sm:$0xf]
    %v101 = vld [vmem:[#allocation5 + $0x3c] sm:$0xf]
    %v118 = vunpack.c.l.b16 %v86
    %v119 = vunpack.c.l.b16 %v87
    %v120 = vunpack.c.l.b16 %v88
    %v121 = vunpack.c.l.b16 %v89
    %v122 = vunpack.c.l.b16 %v90
    %v123 = vunpack.c.l.b16 %v91
    %v124 = vunpack.c.l.b16 %v92
    %v125 = vunpack.c.l.b16 %v93
    %v126 = vunpack.c.l.b16 %v94
    %v127 = vunpack.c.l.b16 %v95
    %v128 = vunpack.c.l.b16 %v96
    %v129 = vunpack.c.l.b16 %v97
    %v130 = vunpack.c.l.b16 %v98
    %v131 = vunpack.c.l.b16 %v99
    %v132 = vunpack.c.l.b16 %v100
    %v133 = vunpack.c.l.b16 %v101
    %v134 = vpack.c.b16 %v119, %v118
    %v135 = vpack.c.b16 %v121, %v120
    %v136 = vpack.c.b16 %v123, %v122
    %v137 = vpack.c.b16 %v125, %v124
    %v138 = vpack.c.b16 %v127, %v126
    %v139 = vpack.c.b16 %v129, %v128
    %v140 = vpack.c.b16 %v131, %v130
    %v141 = vpack.c.b16 %v133, %v132
    %150 = vmatpush.bf16.msra.mxu0 %v141
    %151 = vmatpush.bf16.msra.mxu0 %v140
    %152 = vmatpush.bf16.msra.mxu0 %v139
    %153 = vmatpush.bf16.msra.mxu0 %v138
    %154 = vmatpush.bf16.msra.mxu0 %v137
    %155 = vmatpush.bf16.msra.mxu0 %v136
    %156 = vmatpush.bf16.msra.mxu0 %v135
    %157 = vmatpush.bf16.msra.mxu0 %v134
    %158 = vmatmul.bf16.gmra.mxu0 %v85
    %v159 = vpop.f32.mrf.mxu0
    %v160 = vadd.f32 0.0, %v159
    %v161 = vpop.f32.mrf.mxu0
    %162 = vdwg.mxu0
    %v163 = vpack.c.bf16 %v160, %v160
    %v164 = vld [vmem:[#allocation7] sm:$0xf]
    %v165 = vld [vmem:[#allocation7 + $0x4] sm:$0xf]
    %v166 = vld [vmem:[#allocation7 + $0x8] sm:$0xf]
    %v167 = vld [vmem:[#allocation7 + $0xc] sm:$0xf]
    %v168 = vld [vmem:[#allocation7 + $0x10] sm:$0xf]
    %v169 = vld [vmem:[#allocation7 + $0x14] sm:$0xf]
    %v170 = vld [vmem:[#allocation7 + $0x18] sm:$0xf]
    %v171 = vld [vmem:[#allocation7 + $0x1c] sm:$0xf]
    %v172 = vld [vmem:[#allocation7 + $0x20] sm:$0xf]
    %v173 = vld [vmem:[#allocation7 + $0x24] sm:$0xf]
    %v174 = vld [vmem:[#allocation7 + $0x28] sm:$0xf]
    %v175 = vld [vmem:[#allocation7 + $0x2c] sm:$0xf]
    %v176 = vld [vmem:[#allocation7 + $0x30] sm:$0xf]
    %v177 = vld [vmem:[#allocation7 + $0x34] sm:$0xf]
    %v178 = vld [vmem:[#allocation7 + $0x38] sm:$0xf]
    %v179 = vld [vmem:[#allocation7 + $0x3c] sm:$0xf]
    %v180 = vld [vmem:[%s3] sm:$0x1]
    %v182 = vperm.slane %v180, 0
    %v200 = vunpack.c.l.b16 %v164
    %v201 = vunpack.c.l.b16 %v165
    %v202 = vunpack.c.l.b16 %v166
    %v203 = vunpack.c.l.b16 %v167
    %v204 = vunpack.c.l.b16 %v168
    %v205 = vunpack.c.l.b16 %v169
    %v206 = vunpack.c.l.b16 %v170
    %v207 = vunpack.c.l.b16 %v171
    %v208 = vunpack.c.l.b16 %v172
    %v209 = vunpack.c.l.b16 %v173
    %v210 = vunpack.c.l.b16 %v174
    %v211 = vunpack.c.l.b16 %v175
    %v212 = vunpack.c.l.b16 %v176
    %v213 = vunpack.c.l.b16 %v177
    %v214 = vunpack.c.l.b16 %v178
    %v215 = vunpack.c.l.b16 %v179
    %v216 = vpack.c.b16 %v201, %v200
    %v217 = vpack.c.b16 %v203, %v202
    %v218 = vpack.c.b16 %v205, %v204
    %v219 = vpack.c.b16 %v207, %v206
    %v220 = vpack.c.b16 %v209, %v208
    %v221 = vpack.c.b16 %v211, %v210
    %v222 = vpack.c.b16 %v213, %v212
    %v223 = vpack.c.b16 %v215, %v214
    %232 = vmatpush.bf16.msra.mxu0 %v223
    %233 = vmatpush.bf16.msra.mxu0 %v222
    %234 = vmatpush.bf16.msra.mxu0 %v221
    %235 = vmatpush.bf16.msra.mxu0 %v220
    %236 = vmatpush.bf16.msra.mxu0 %v219
    %237 = vmatpush.bf16.msra.mxu0 %v218
    %238 = vmatpush.bf16.msra.mxu0 %v217
    %239 = vmatpush.bf16.msra.mxu0 %v216
    %240 = vmatmul.bf16.gmra.mxu0 %v163
    %v241 = vpop.f32.mrf.mxu0
    %v242 = vadd.f32 %v182, %v241
    %v243 = vpop.f32.mrf.mxu0
    %244 = vdwg.mxu0
    %v245 = vmax.f32 %v242, 0.0
    %v246 = vpack.c.bf16 %v245, %v245
    %v247 = vld [vmem:[#allocation8] sm:$0xf]
    %v248 = vld [vmem:[#allocation8 + $0x4] sm:$0xf]
    %v249 = vld [vmem:[#allocation8 + $0x8] sm:$0xf]
    %v250 = vld [vmem:[#allocation8 + $0xc] sm:$0xf]
    %v251 = vld [vmem:[#allocation8 + $0x10] sm:$0xf]
    %v252 = vld [vmem:[#allocation8 + $0x14] sm:$0xf]
    %v253 = vld [vmem:[#allocation8 + $0x18] sm:$0xf]
    %v254 = vld [vmem:[#allocation8 + $0x1c] sm:$0xf]
    %v255 = vld [vmem:[#allocation8 + $0x20] sm:$0xf]
    %v256 = vld [vmem:[#allocation8 + $0x24] sm:$0xf]
    %v257 = vld [vmem:[#allocation8 + $0x28] sm:$0xf]
    %v258 = vld [vmem:[#allocation8 + $0x2c] sm:$0xf]
    %v259 = vld [vmem:[#allocation8 + $0x30] sm:$0xf]
    %v260 = vld [vmem:[#allocation8 + $0x34] sm:$0xf]
    %v261 = vld [vmem:[#allocation8 + $0x38] sm:$0xf]
    %v262 = vld [vmem:[#allocation8 + $0x3c] sm:$0xf]
    %v263 = vld [vmem:[%s5] sm:$0x1]
    %v265 = vperm.slane %v263, 0
    %v283 = vunpack.c.l.b16 %v247
    %v284 = vunpack.c.l.b16 %v248
    %v285 = vunpack.c.l.b16 %v249
    %v286 = vunpack.c.l.b16 %v250
    %v287 = vunpack.c.l.b16 %v251
    %v288 = vunpack.c.l.b16 %v252
    %v289 = vunpack.c.l.b16 %v253
    %v290 = vunpack.c.l.b16 %v254
    %v291 = vunpack.c.l.b16 %v255
    %v292 = vunpack.c.l.b16 %v256
    %v293 = vunpack.c.l.b16 %v257
    %v294 = vunpack.c.l.b16 %v258
    %v295 = vunpack.c.l.b16 %v259
    %v296 = vunpack.c.l.b16 %v260
    %v297 = vunpack.c.l.b16 %v261
    %v298 = vunpack.c.l.b16 %v262
    %v299 = vpack.c.b16 %v284, %v283
    %v300 = vpack.c.b16 %v286, %v285
    %v301 = vpack.c.b16 %v288, %v287
    %v302 = vpack.c.b16 %v290, %v289
    %v303 = vpack.c.b16 %v292, %v291
    %v304 = vpack.c.b16 %v294, %v293
    %v305 = vpack.c.b16 %v296, %v295
    %v306 = vpack.c.b16 %v298, %v297
    %315 = vmatpush.bf16.msra.mxu0 %v306
    %316 = vmatpush.bf16.msra.mxu0 %v305
    %317 = vmatpush.bf16.msra.mxu0 %v304
    %318 = vmatpush.bf16.msra.mxu0 %v303
    %319 = vmatpush.bf16.msra.mxu0 %v302
    %320 = vmatpush.bf16.msra.mxu0 %v301
    %321 = vmatpush.bf16.msra.mxu0 %v300
    %322 = vmatpush.bf16.msra.mxu0 %v299
    %323 = vmatmul.bf16.gmra.mxu0 %v246
    %v324 = vpop.f32.mrf.mxu0
    %v325 = vadd.f32 %v265, %v324
    %v326 = vpop.f32.mrf.mxu0
    %327 = vdwg.mxu0
    %328 = vst [vmem:[#allocation10] sm:$0xff] %v325
    // Predicated region
    $region42: #{tpu_custom_call.1} parent=1 // pred_check
      _
    $region43: #{tpu_custom_call.1} parent=1 // pred_check_branch
      %330 = sbr.rel (0) target = $region45
    $region44: #{tpu_custom_call.1} parent=1 // pred_region
      %332 = vsyncadd [#allocation4], 0
      %s334 = sshll.u32 [#allocation10], 4
      %s335 = int_to_ptr.vmem [resolvable:$true] %s334
      %s336 = sshll.u32 %s6, 4
      %s337 = int_to_ptr.hbm [resolvable:$true] %s336
      %339 = dma.vmem_to_hbm [thread:$0]  %s335, 128, %s337, [#allocation4]
    $region45: #{tpu_custom_call.1} parent=1 // pred_fallthru
      _
    // Predicated region
    $region46: #{tpu_custom_call.1} parent=1 // pred_check
      _
    $region47: #{tpu_custom_call.1} parent=1 // pred_check_branch
      %341 = sbr.rel (0) target = $region49
    $region48: #{tpu_custom_call.1} parent=1 // pred_region
      %343 = dma.done [#allocation4], 128
    $region49: #{tpu_custom_call.1} parent=1 // pred_fallthru
      _
    %344 = vsyncpa [#allocation3], 1
    %345 = vsyncpa [#allocation6], 1
    %346 = vsyncpa [#allocation9], 1
    %347 = vsyncpa [#allocation4], 1

</llo_original>
